<compile_context>
chip_gen: v5e
topology: v5e:2x2
jax: 0.10.0
libtpu: 0.0.40
codegen_flags: <defaults>
</compile_context>

<pallas_src>
import jax
import jax.numpy as jnp
from jax.experimental import pallas as pl
from jax.experimental.pallas import tpu as pltpu


def _softplus(x):
    # numerically stable softplus: log(1 + exp(x))
    return jnp.logaddexp(x, 0.0)


def _variational_linear_kernel(x_ref, wmu_ref, wrho_ref, weps_ref,
                               bmu_ref, brho_ref, beps_ref, o_ref, acc_ref):
    j = pl.program_id(1)            # out_features tile index
    k = pl.program_id(2)            # in_features (reduction) tile index
    nk = pl.num_programs(2)

    @pl.when(k == 0)
    def _():
        acc_ref[...] = jnp.zeros_like(acc_ref)

    # Reparameterization trick on the weight tile (VPU elementwise, softplus
    # exp/log on EUP), then MXU matmul in (M,K)x(K,N) orientation with f32
    # accumulation into the resident scratch.
    w = wmu_ref[...] + weps_ref[...] * _softplus(wrho_ref[...])          # (TK, TN)
    acc_ref[...] += jnp.dot(x_ref[...], w, preferred_element_type=jnp.float32)

    @pl.when(k == nk - 1)
    def _():
        tn = o_ref.shape[-1]
        sl = pl.ds(j * tn, tn)
        b = bmu_ref[:, sl] + beps_ref[:, sl] * _softplus(brho_ref[:, sl])  # (1, TN)
        o_ref[...] = (acc_ref[...] + b).astype(o_ref.dtype)


def _pick_divisor(dim, candidates):
    for c in candidates:
        if dim % c == 0:
            return c
    return dim  # fall back to the full extent (always a legal block dim)


def variational_linear(x, weight_mu, weight_rho, bias_mu, bias_rho, key):
    """Pallas implementation of VariationalLayer.forward.

    x:          (batch, in_features)
    weight_mu:  (out_features, in_features)   -- nn.Linear layout
    weight_rho: (out_features, in_features)
    bias_mu:    (out_features,)
    bias_rho:   (out_features,)
    key:        jax.random key driving the Gaussian noise (randn_like)
    """
    batch, in_features = x.shape
    out_features = weight_mu.shape[0]
    f32 = 4

    # Pad out_features to a lane-dense multiple of 128; padded columns are
    # computed on zero parameters and sliced off at the end.
    out_pad = ((out_features + 127) // 128) * 128
    pad_cols = out_pad - out_features

    # Present weights as (in_features, out_features).
    wmu_t = jnp.pad(weight_mu.T, ((0, 0), (0, pad_cols)))
    wrho_t = jnp.pad(weight_rho.T, ((0, 0), (0, pad_cols)))
    bmu_row = jnp.pad(bias_mu.reshape(1, -1), ((0, 0), (0, pad_cols)))
    brho_row = jnp.pad(bias_rho.reshape(1, -1), ((0, 0), (0, pad_cols)))

    # N(0,1) noise, same semantics as torch.randn_like (iid, so drawing it
    # directly in the transposed/padded layout is equivalent).
    k_w, k_b = jax.random.split(key)
    eps_w = jax.random.normal(k_w, (in_features, out_pad), dtype=jnp.float32)
    eps_b = jax.random.normal(k_b, (1, out_pad), dtype=jnp.float32)

    # Tile sizes.
    tm = _pick_divisor(batch, (256, 128))                   # batch tile
    tk = _pick_divisor(in_features, (1024, 512, 256, 128))  # reduction tile
    tn = 256 if (out_pad % 256 == 0 and out_pad // 256 >= 2) else 128
    ni, nj, nk = batch // tm, out_pad // tn, in_features // tk

    # VMEM budget (double-buffered streamed tiles, resident bias rows, f32
    # accumulator and the materialized reparameterized weight intermediate).
    vmem_need = (
        2 * tm * tk * f32            # x tile (double-buffered)
        + 2 * 3 * tk * tn * f32      # wmu / wrho / eps_w tiles (double-buffered)
        + 2 * tm * tn * f32          # output tile (double-buffered)
        + 2 * 3 * out_pad * f32      # resident bias mu / rho / eps rows
        + tm * tn * f32              # f32 accumulator scratch
        + 2 * tk * tn * f32          # materialized w + softplus intermediate
    )
    try:
        vmem_cap = int(pltpu.get_tpu_info().vmem_capacity_bytes) * 3 // 4
    except Exception:
        vmem_cap = 48 * 1024 * 1024  # safe headroom on v7x's 64 MiB physical VMEM
    vmem_limit = max(16 * 1024 * 1024, min(int(vmem_need * 1.3), vmem_cap))

    cost = pl.CostEstimate(
        flops=2 * batch * out_pad * in_features,
        transcendentals=2 * (in_features * out_pad + out_pad),  # softplus exp+log
        bytes_accessed=f32 * (batch * in_features
                              + 3 * in_features * out_pad
                              + 3 * out_pad
                              + batch * out_pad),
    )

    grid_spec = pltpu.PrefetchScalarGridSpec(
        num_scalar_prefetch=0,
        grid=(ni, nj, nk),
        in_specs=[
            pl.BlockSpec((tm, tk), lambda i, j, k: (i, k)),       # x tile
            pl.BlockSpec((tk, tn), lambda i, j, k: (k, j)),       # weight mu^T tile
            pl.BlockSpec((tk, tn), lambda i, j, k: (k, j)),       # weight rho^T tile
            pl.BlockSpec((tk, tn), lambda i, j, k: (k, j)),       # weight eps tile
            pl.BlockSpec((1, out_pad), lambda i, j, k: (0, 0)),   # bias mu (resident)
            pl.BlockSpec((1, out_pad), lambda i, j, k: (0, 0)),   # bias rho (resident)
            pl.BlockSpec((1, out_pad), lambda i, j, k: (0, 0)),   # bias eps (resident)
        ],
        out_specs=pl.BlockSpec((tm, tn), lambda i, j, k: (i, j)),
        scratch_shapes=[pltpu.VMEM((tm, tn), jnp.float32)],
    )

    out_padded = pl.pallas_call(
        _variational_linear_kernel,
        out_shape=jax.ShapeDtypeStruct((batch, out_pad), x.dtype),
        grid_spec=grid_spec,
        compiler_params=pltpu.CompilerParams(
            dimension_semantics=("parallel", "parallel", "arbitrary"),
            vmem_limit_bytes=vmem_limit,
        ),
        cost_estimate=cost,
    )(x, wmu_t, wrho_t, eps_w, bmu_row, brho_row, eps_b)

    return out_padded[:, :out_features]


if __name__ == "__main__":
    def reference(x, weight_mu, weight_rho, bias_mu, bias_rho, key):
        # Replays exactly the same noise draws as the wrapper.
        in_f = x.shape[1]
        out_f = weight_mu.shape[0]
        out_p = ((out_f + 127) // 128) * 128
        k_w, k_b = jax.random.split(key)
        eps_w = jax.random.normal(k_w, (in_f, out_p), dtype=jnp.float32)
        eps_b = jax.random.normal(k_b, (1, out_p), dtype=jnp.float32)
        weight = weight_mu + eps_w[:, :out_f].T * jax.nn.softplus(weight_rho)
        bias = bias_mu + eps_b[0, :out_f] * jax.nn.softplus(bias_rho)
        return x @ weight.T + bias

    # --- Small shapes consistent with the module: batch=8, in=32, out=16 ---
    batch, in_features, out_features = 8, 32, 16
    key = jax.random.PRNGKey(0)
    k_x, k_wmu, k_wrho, k_bmu, k_brho, k_eps = jax.random.split(key, 6)

    x = jax.random.normal(k_x, (batch, in_features), dtype=jnp.float32)
    weight_mu = 0.1 * jax.random.normal(k_wmu, (out_features, in_features), jnp.float32)
    weight_rho = -3.0 + 0.1 * jax.random.normal(k_wrho, (out_features, in_features), jnp.float32)
    bias_mu = 0.1 * jax.random.normal(k_bmu, (out_features,), jnp.float32)
    bias_rho = -3.0 + 0.1 * jax.random.normal(k_brho, (out_features,), jnp.float32)

    # 1) Deterministic path: sigma = softplus(-40) ~ 0 -> plain linear layer.
    rho_off = jnp.full_like(weight_rho, -40.0)
    brho_off = jnp.full_like(bias_rho, -40.0)
    out_det = variational_linear(x, weight_mu, rho_off, bias_mu, brho_off, k_eps)
    jax.block_until_ready(out_det)
    ref_det = x @ weight_mu.T + bias_mu
    assert out_det.shape == (batch, out_features)
    assert jnp.allclose(out_det, ref_det, atol=1e-5, rtol=1e-5), "deterministic path mismatch"

    # 2) Stochastic path: exact match vs. pure-JAX reference with the same
    #    noise draws; reproducibility / sensitivity w.r.t. the key.
    out_a = variational_linear(x, weight_mu, weight_rho, bias_mu, bias_rho, k_eps)
    out_b = variational_linear(x, weight_mu, weight_rho, bias_mu, bias_rho, k_eps)
    out_c = variational_linear(x, weight_mu, weight_rho, bias_mu, bias_rho,
                               jax.random.PRNGKey(456))
    jax.block_until_ready((out_a, out_b, out_c))
    ref_a = reference(x, weight_mu, weight_rho, bias_mu, bias_rho, k_eps)
    assert jnp.allclose(out_a, ref_a, atol=1e-5, rtol=1e-5), "stochastic path mismatch"
    assert bool(jnp.array_equal(out_a, out_b)), "same key should reproduce exactly"
    assert not bool(jnp.allclose(out_a, out_c)), "different keys should differ"
    assert bool(jnp.all(jnp.isfinite(out_a))), "non-finite output"

    # 3) Multi-tile path: out_features multiple of 128 (3 out tiles) and an
    #    in_features that exercises several K reduction tiles (tk=128, nk=5).
    b2, in2, out2 = 16, 640, 384
    key2 = jax.random.PRNGKey(1)
    kx2, kwm2, kwr2, kbm2, kbr2, ke2 = jax.random.split(key2, 6)
    x2 = jax.random.normal(kx2, (b2, in2), jnp.float32)
    wmu2 = 0.05 * jax.random.normal(kwm2, (out2, in2), jnp.float32)
    wrho2 = -3.0 + 0.1 * jax.random.normal(kwr2, (out2, in2), jnp.float32)
    bmu2 = 0.05 * jax.random.normal(kbm2, (out2,), jnp.float32)
    brho2 = -3.0 + 0.1 * jax.random.normal(kbr2, (out2,), jnp.float32)
    out2_k = variational_linear(x2, wmu2, wrho2, bmu2, brho2, ke2)
    jax.block_until_ready(out2_k)
    ref2 = reference(x2, wmu2, wrho2, bmu2, brho2, ke2)
    assert out2_k.shape == (b2, out2)
    assert jnp.allclose(out2_k, ref2, atol=1e-4, rtol=1e-4), "multi-tile path mismatch"

    print("KERNEL_OK")
</pallas_src>

<mosaic_0001>
module attributes {stable_mosaic.version = 11 : i64} {
  func.func @_variational_linear_kernel(%arg0: i32, %arg1: i32, %arg2: i32, %arg3: memref<8x32xf32, #tpu.memory_space<vmem>>, %arg4: memref<32x128xf32, #tpu.memory_space<vmem>>, %arg5: memref<32x128xf32, #tpu.memory_space<vmem>>, %arg6: memref<32x128xf32, #tpu.memory_space<vmem>>, %arg7: memref<1x128xf32, #tpu.memory_space<vmem>>, %arg8: memref<1x128xf32, #tpu.memory_space<vmem>>, %arg9: memref<1x128xf32, #tpu.memory_space<vmem>>, %arg10: memref<8x128xf32, #tpu.memory_space<vmem>>, %arg11: memref<8x128xf32, #tpu.memory_space<vmem>>) attributes {dimension_semantics = [#tpu.dimension_semantics<parallel>, #tpu.dimension_semantics<parallel>, #tpu.dimension_semantics<arbitrary>], iteration_bounds = array<i64: 1, 1, 1>, scalar_prefetch = 0 : i64, scratch_operands = 1 : i64, tpu.core_type = #tpu.core_type<tc>, window_params = [{transform_indices = @transform_0, window_bounds = array<i64: 8, 32>}, {transform_indices = @transform_1, window_bounds = array<i64: 32, 128>}, {transform_indices = @transform_2, window_bounds = array<i64: 32, 128>}, {transform_indices = @transform_3, window_bounds = array<i64: 32, 128>}, {pipeline_mode = #tpu.pipeline_mode<synchronous>, transform_indices = @transform_4, window_bounds = array<i64: 1, 128>}, {pipeline_mode = #tpu.pipeline_mode<synchronous>, transform_indices = @transform_5, window_bounds = array<i64: 1, 128>}, {pipeline_mode = #tpu.pipeline_mode<synchronous>, transform_indices = @transform_6, window_bounds = array<i64: 1, 128>}, {transform_indices = @transform_7, window_bounds = array<i64: 8, 128>}]} {
    %c0_i32 = arith.constant 0 : i32
    %0 = arith.cmpi eq, %arg2, %c0_i32 : i32
    %1 = arith.extui %0 : i1 to i32
    %c0_i32_0 = arith.constant 0 : i32
    %2 = arith.cmpi ne, %1, %c0_i32_0 : i32
    scf.if %2 {
      %cst_16 = arith.constant 0.000000e+00 : f32
      %30 = vector.broadcast %cst_16 : f32 to vector<8x128xf32>
      %c0_17 = arith.constant 0 : index
      %c0_18 = arith.constant 0 : index
      %31 = vector.load %arg11[%c0_17, %c0_18] : memref<8x128xf32, #tpu.memory_space<vmem>>, vector<8x128xf32>
      tpu.vector_store %arg11[%c0_17, %c0_18], %30 {strides = array<i32>} : memref<8x128xf32, #tpu.memory_space<vmem>>, vector<8x128xf32>,
    } else {
    }
    %c0 = arith.constant 0 : index
    %c0_1 = arith.constant 0 : index
    %3 = vector.load %arg4[%c0, %c0_1] : memref<32x128xf32, #tpu.memory_space<vmem>>, vector<32x128xf32>
    %c0_2 = arith.constant 0 : index
    %c0_3 = arith.constant 0 : index
    %4 = vector.load %arg6[%c0_2, %c0_3] : memref<32x128xf32, #tpu.memory_space<vmem>>, vector<32x128xf32>
    %c0_4 = arith.constant 0 : index
    %c0_5 = arith.constant 0 : index
    %5 = vector.load %arg5[%c0_4, %c0_5] : memref<32x128xf32, #tpu.memory_space<vmem>>, vector<32x128xf32>
    %cst = arith.constant 0.000000e+00 : f32
    %6 = vector.broadcast %cst : f32 to vector<32x128xf32>
    %7 = arith.maximumf %5, %6 : vector<32x128xf32>
    %8 = vector.broadcast %cst : f32 to vector<32x128xf32>
    %9 = arith.subf %5, %8 : vector<32x128xf32>
    %10 = arith.cmpf one, %9, %9 : vector<32x128xf32>
    %11 = vector.broadcast %cst : f32 to vector<32x128xf32>
    %12 = arith.addf %5, %11 : vector<32x128xf32>
    %13 = math.absf %9 : vector<32x128xf32>
    %cst_6 = arith.constant 0.000000e+00 : f32
    %14 = vector.broadcast %cst_6 : f32 to vector<32x128xf32>
    %15 = arith.subf %14, %13 : vector<32x128xf32>
    %16 = math.exp %15 : vector<32x128xf32>
    %17 = math.log1p %16 : vector<32x128xf32>
    %18 = arith.addf %7, %17 : vector<32x128xf32>
    %19 = arith.select %10, %12, %18 : vector<32x128xi1>, vector<32x128xf32>
    %20 = arith.mulf %4, %19 : vector<32x128xf32>
    %21 = arith.addf %3, %20 : vector<32x128xf32>
    %c0_7 = arith.constant 0 : index
    %c0_8 = arith.constant 0 : index
    %22 = vector.load %arg11[%c0_7, %c0_8] : memref<8x128xf32, #tpu.memory_space<vmem>>, vector<8x128xf32>
    %c0_9 = arith.constant 0 : index
    %c0_10 = arith.constant 0 : index
    %23 = vector.load %arg3[%c0_9, %c0_10] : memref<8x32xf32, #tpu.memory_space<vmem>>, vector<8x32xf32>
    %cst_11 = arith.constant dense<0.000000e+00> : vector<8x128xf32>
    %24 = tpu.matmul %23, %21, %cst_11 {dimension_numbers = #tpu.dot_dimension_numbers<[1], [0], [0], [1], [0, 0, 1, 1], [], []>} : vector<8x32xf32>, vector<32x128xf32>, vector<8x128xf32> -> vector<8x128xf32>
    %25 = arith.addf %22, %24 : vector<8x128xf32>
    %c0_12 = arith.constant 0 : index
    %c0_13 = arith.constant 0 : index
    %26 = vector.load %arg11[%c0_12, %c0_13] : memref<8x128xf32, #tpu.memory_space<vmem>>, vector<8x128xf32>
    tpu.vector_store %arg11[%c0_12, %c0_13], %25 {strides = array<i32>} : memref<8x128xf32, #tpu.memory_space<vmem>>, vector<8x128xf32>,
    %c0_i32_14 = arith.constant 0 : i32
    %27 = arith.cmpi eq, %arg2, %c0_i32_14 : i32
    %28 = arith.extui %27 : i1 to i32
    %c0_i32_15 = arith.constant 0 : i32
    %29 = arith.cmpi ne, %28, %c0_i32_15 : i32
    scf.if %29 {
      %c128_i32 = arith.constant 128 : i32
      %30 = arith.muli %arg1, %c128_i32 : i32
      %c0_16 = arith.constant 0 : index
      %31 = arith.index_cast %30 : i32 to index
      %32 = vector.load %arg7[%c0_16, %31] : memref<1x128xf32, #tpu.memory_space<vmem>>, vector<1x128xf32>
      %c0_17 = arith.constant 0 : index
      %33 = arith.index_cast %30 : i32 to index
      %34 = vector.load %arg9[%c0_17, %33] : memref<1x128xf32, #tpu.memory_space<vmem>>, vector<1x128xf32>
      %c0_18 = arith.constant 0 : index
      %35 = arith.index_cast %30 : i32 to index
      %36 = vector.load %arg8[%c0_18, %35] : memref<1x128xf32, #tpu.memory_space<vmem>>, vector<1x128xf32>
      %cst_19 = arith.constant 0.000000e+00 : f32
      %37 = vector.broadcast %cst_19 : f32 to vector<1x128xf32>
      %38 = arith.maximumf %36, %37 : vector<1x128xf32>
      %39 = vector.broadcast %cst_19 : f32 to vector<1x128xf32>
      %40 = arith.subf %36, %39 : vector<1x128xf32>
      %41 = arith.cmpf one, %40, %40 : vector<1x128xf32>
      %42 = vector.broadcast %cst_19 : f32 to vector<1x128xf32>
      %43 = arith.addf %36, %42 : vector<1x128xf32>
      %44 = math.absf %40 : vector<1x128xf32>
      %cst_20 = arith.constant 0.000000e+00 : f32
      %45 = vector.broadcast %cst_20 : f32 to vector<1x128xf32>
      %46 = arith.subf %45, %44 : vector<1x128xf32>
      %47 = math.exp %46 : vector<1x128xf32>
      %48 = math.log1p %47 : vector<1x128xf32>
      %49 = arith.addf %38, %48 : vector<1x128xf32>
      %50 = arith.select %41, %43, %49 : vector<1x128xi1>, vector<1x128xf32>
      %51 = arith.mulf %34, %50 : vector<1x128xf32>
      %52 = arith.addf %32, %51 : vector<1x128xf32>
      %c0_21 = arith.constant 0 : index
      %c0_22 = arith.constant 0 : index
      %53 = vector.load %arg11[%c0_21, %c0_22] : memref<8x128xf32, #tpu.memory_space<vmem>>, vector<8x128xf32>
      %54 = vector.broadcast %52 : vector<1x128xf32> to vector<8x128xf32>
      %55 = arith.addf %53, %54 : vector<8x128xf32>
      %c0_23 = arith.constant 0 : index
      %c0_24 = arith.constant 0 : index
      %56 = vector.load %arg10[%c0_23, %c0_24] : memref<8x128xf32, #tpu.memory_space<vmem>>, vector<8x128xf32>
      tpu.vector_store %arg10[%c0_23, %c0_24], %55 {strides = array<i32>} : memref<8x128xf32, #tpu.memory_space<vmem>>, vector<8x128xf32>,
    } else {
    }
    return
  }
  func.func @transform_0(%arg0: i32, %arg1: i32, %arg2: i32) -> (i32, i32) {
    %c0_i32 = arith.constant 0 : i32
    return %arg0, %arg2 : i32, i32
  }
  func.func @transform_1(%arg0: i32, %arg1: i32, %arg2: i32) -> (i32, i32) {
    %c0_i32 = arith.constant 0 : i32
    return %arg2, %arg1 : i32, i32
  }
  func.func @transform_2(%arg0: i32, %arg1: i32, %arg2: i32) -> (i32, i32) {
    %c0_i32 = arith.constant 0 : i32
    return %arg2, %arg1 : i32, i32
  }
  func.func @transform_3(%arg0: i32, %arg1: i32, %arg2: i32) -> (i32, i32) {
    %c0_i32 = arith.constant 0 : i32
    return %arg2, %arg1 : i32, i32
  }
  func.func @transform_4(%arg0: i32, %arg1: i32, %arg2: i32) -> (i32, i32) {
    %c0_i32 = arith.constant 0 : i32
    %c0_i32_0 = arith.constant 0 : i32
    %c0_i32_1 = arith.constant 0 : i32
    return %c0_i32, %c0_i32_0 : i32, i32
  }
  func.func @transform_5(%arg0: i32, %arg1: i32, %arg2: i32) -> (i32, i32) {
    %c0_i32 = arith.constant 0 : i32
    %c0_i32_0 = arith.constant 0 : i32
    %c0_i32_1 = arith.constant 0 : i32
    return %c0_i32, %c0_i32_0 : i32, i32
  }
  func.func @transform_6(%arg0: i32, %arg1: i32, %arg2: i32) -> (i32, i32) {
    %c0_i32 = arith.constant 0 : i32
    %c0_i32_0 = arith.constant 0 : i32
    %c0_i32_1 = arith.constant 0 : i32
    return %c0_i32, %c0_i32_0 : i32, i32
  }
  func.func @transform_7(%arg0: i32, %arg1: i32, %arg2: i32) -> (i32, i32) {
    %c0_i32 = arith.constant 0 : i32
    return %arg0, %arg1 : i32, i32
  }
}

</mosaic_0001>

<llo_original>
// kernel: tpu_custom_call.1
$region0: #{tpu_custom_call.1}
  #allocation0 [shape = 'u32[]', space=smem, size = 0x4, offset = 0x4, fixed_abs, tag = 'smem constant byte address 0x4 - core index']
  #allocation1 [shape = 'u32[72,128]{1,0:T(1,128)}', space=vmem, size = 0x9000, scoped, tag = 'internal scratch']
  #allocation2 [shape = 'f32[8,128]{1,0:T(8,128)}', space=vmem, size = 0x1000, scoped, tag = 'scratch operand']
  %s0 = inlined_call_operand.hbm [shape: f32[8,32], index: 0, kind: input, shape index: {}]
  %s1 = inlined_call_operand.hbm [shape: f32[32,128], index: 1, kind: input, shape index: {}]
  %s2 = inlined_call_operand.hbm [shape: f32[32,128], index: 2, kind: input, shape index: {}]
  %s3 = inlined_call_operand.hbm [shape: f32[32,128], index: 3, kind: input, shape index: {}]
  %s4 = inlined_call_operand.vmem [shape: f32[1,128], index: 4, kind: input, shape index: {}]
  %s5 = inlined_call_operand.vmem [shape: f32[1,128], index: 5, kind: input, shape index: {}]
  %s6 = inlined_call_operand.vmem [shape: f32[1,128], index: 6, kind: input, shape index: {}]
  %s7 = inlined_call_operand.hbm [shape: f32[8,128], index: 7, kind: output, shape index: {}]
  %s8 = sld [smem:[#allocation0]]
  $region62: #{tpu_custom_call.1} parent=0
    _
  %s10 = ssub.s32 1, %s8
  %s11 = scalar_select 0, %s10, %s8
  $region1: #{tpu_custom_call.1} parent=0
    #allocation3 [shape = 'u8[4096]{0}', space=vmem, size = 0x1000, scoped, tag = 'input window, operand 0, single buffered']
    #allocation4 [shape = 's32[1]{0}', space=sflag, size = 0x4, scoped, tag = 'scoped memory for tpu_custom_call.1']
    #allocation5 [shape = 's32[1]{0}', space=sflag, size = 0x4, scoped, tag = 'scoped memory for tpu_custom_call.1']
    #allocation6 [shape = 'u8[16384]{0}', space=vmem, size = 0x4000, scoped, tag = 'input window, operand 1, single buffered']
    #allocation7 [shape = 's32[1]{0}', space=sflag, size = 0x4, scoped, tag = 'scoped memory for tpu_custom_call.1']
    #allocation8 [shape = 'u8[16384]{0}', space=vmem, size = 0x4000, scoped, tag = 'input window, operand 2, single buffered']
    #allocation9 [shape = 'u8[16384]{0}', space=vmem, size = 0x4000, scoped, tag = 'input window, operand 3, single buffered']
    #allocation10 [shape = 's32[1]{0}', space=sflag, size = 0x4, scoped, tag = 'scoped memory for tpu_custom_call.1']
    #allocation11 [shape = 'u8[4096]{0}', space=vmem, size = 0x1000, scoped, tag = 'output window, operand 0, single buffered']
    %12 = vsyncpa [#allocation4], 0
    %13 = vsyncpa [#allocation7], 0
    %14 = vsyncpa [#allocation10], 0
    %15 = vsyncpa [#allocation5], 0
    // Predicated region
    $region2: #{tpu_custom_call.1} parent=1 // pred_check
      _
    $region3: #{tpu_custom_call.1} parent=1 // pred_check_branch
      %17 = sbr.rel (0) target = $region5
    $region4: #{tpu_custom_call.1} parent=1 // pred_region
      %19 = vsyncadd [#allocation4], 0
      %s21 = sshll.u32 %s0, 4
      %s22 = int_to_ptr.hbm [resolvable:$true] %s21
      %s23 = sshll.u32 [#allocation3], 4
      %s24 = int_to_ptr.vmem [resolvable:$true] %s23
      %26 = dma.hbm_to_vmem [thread:$0]  %s22, 128, %s24, [#allocation4]
    $region5: #{tpu_custom_call.1} parent=1 // pred_fallthru
      _
    // Predicated region
    $region6: #{tpu_custom_call.1} parent=1 // pred_check
      _
    $region7: #{tpu_custom_call.1} parent=1 // pred_check_branch
      %28 = sbr.rel (0) target = $region9
    $region8: #{tpu_custom_call.1} parent=1 // pred_region
      %30 = vsyncadd [#allocation7], 0
      %s31 = sshll.u32 %s1, 4
      %s32 = int_to_ptr.hbm [resolvable:$true] %s31
      %s33 = sshll.u32 [#allocation6], 4
      %s34 = int_to_ptr.vmem [resolvable:$true] %s33
      %39 = dma.hbm_to_vmem [thread:$0]  %s32, 512, %s34, [#allocation7], 128, 128, 8
    $region9: #{tpu_custom_call.1} parent=1 // pred_fallthru
      _
    // Predicated region
    $region10: #{tpu_custom_call.1} parent=1 // pred_check
      _
    $region11: #{tpu_custom_call.1} parent=1 // pred_check_branch
      %41 = sbr.rel (0) target = $region13
    $region12: #{tpu_custom_call.1} parent=1 // pred_region
      %43 = vsyncadd [#allocation7], 0
      %s44 = sshll.u32 %s2, 4
      %s45 = int_to_ptr.hbm [resolvable:$true] %s44
      %s46 = sshll.u32 [#allocation8], 4
      %s47 = int_to_ptr.vmem [resolvable:$true] %s46
      %52 = dma.hbm_to_vmem [thread:$0]  %s45, 512, %s47, [#allocation7], 128, 128, 8
    $region13: #{tpu_custom_call.1} parent=1 // pred_fallthru
      _
    // Predicated region
    $region14: #{tpu_custom_call.1} parent=1 // pred_check
      _
    $region15: #{tpu_custom_call.1} parent=1 // pred_check_branch
      %54 = sbr.rel (0) target = $region17
    $region16: #{tpu_custom_call.1} parent=1 // pred_region
      %56 = vsyncadd [#allocation10], 0
      %s57 = sshll.u32 %s3, 4
      %s58 = int_to_ptr.hbm [resolvable:$true] %s57
      %s59 = sshll.u32 [#allocation9], 4
      %s60 = int_to_ptr.vmem [resolvable:$true] %s59
      %65 = dma.hbm_to_vmem [thread:$0]  %s58, 512, %s60, [#allocation10], 128, 128, 8
    $region17: #{tpu_custom_call.1} parent=1 // pred_fallthru
      _
    // Predicated region
    $region18: #{tpu_custom_call.1} parent=1 // pred_check
      _
    $region19: #{tpu_custom_call.1} parent=1 // pred_check_branch
      %67 = sbr.rel (0) target = $region21
    $region20: #{tpu_custom_call.1} parent=1 // pred_region
      _
    $region21: #{tpu_custom_call.1} parent=1 // pred_fallthru
      _
    // Predicated region
    $region22: #{tpu_custom_call.1} parent=1 // pred_check
      _
    $region23: #{tpu_custom_call.1} parent=1 // pred_check_branch
      %69 = sbr.rel (0) target = $region25
    $region24: #{tpu_custom_call.1} parent=1 // pred_region
      _
    $region25: #{tpu_custom_call.1} parent=1 // pred_fallthru
      _
    // Predicated region
    $region26: #{tpu_custom_call.1} parent=1 // pred_check
      _
    $region27: #{tpu_custom_call.1} parent=1 // pred_check_branch
      %71 = sbr.rel (0) target = $region29
    $region28: #{tpu_custom_call.1} parent=1 // pred_region
      _
    $region29: #{tpu_custom_call.1} parent=1 // pred_fallthru
      _
    // Predicated region
    $region30: #{tpu_custom_call.1} parent=1 // pred_check
      _
    $region31: #{tpu_custom_call.1} parent=1 // pred_check_branch
      %73 = sbr.rel (0) target = $region33
    $region32: #{tpu_custom_call.1} parent=1 // pred_region
      %75 = dma.done [#allocation4], 128
    $region33: #{tpu_custom_call.1} parent=1 // pred_fallthru
      _
    // Predicated region
    $region34: #{tpu_custom_call.1} parent=1 // pred_check
      _
    $region35: #{tpu_custom_call.1} parent=1 // pred_check_branch
      %77 = sbr.rel (0) target = $region37
    $region36: #{tpu_custom_call.1} parent=1 // pred_region
      %79 = dma.done [#allocation7], 512
    $region37: #{tpu_custom_call.1} parent=1 // pred_fallthru
      _
    // Predicated region
    $region38: #{tpu_custom_call.1} parent=1 // pred_check
      _
    $region39: #{tpu_custom_call.1} parent=1 // pred_check_branch
      %81 = sbr.rel (0) target = $region41
    $region40: #{tpu_custom_call.1} parent=1 // pred_region
      %83 = dma.done [#allocation7], 512
    $region41: #{tpu_custom_call.1} parent=1 // pred_fallthru
      _
    // Predicated region
    $region42: #{tpu_custom_call.1} parent=1 // pred_check
      _
    $region43: #{tpu_custom_call.1} parent=1 // pred_check_branch
      %85 = sbr.rel (0) target = $region45
    $region44: #{tpu_custom_call.1} parent=1 // pred_region
      %87 = dma.done [#allocation10], 512
    $region45: #{tpu_custom_call.1} parent=1 // pred_fallthru
      _
    %p88 = scmp.eq.s32.totalorder 0, 0
    // Predicated region
    $region46: #{tpu_custom_call.1} parent=1 // pred_check
      %p89 = pneg %p88
    $region47: #{tpu_custom_call.1} parent=1 // pred_check_branch
      %91 = sbr.rel (%p89) target = $region49
    $region48: #{tpu_custom_call.1} parent=1 // pred_region
      %92 = vst [vmem:[#allocation2] sm:$0xff] 0.0
    $region49: #{tpu_custom_call.1} parent=1 // pred_fallthru
      _
    %v93 = vld [vmem:[#allocation6] sm:$0xff]
    %v94 = vld [vmem:[#allocation6 + $0x8] sm:$0xff]
    %v95 = vld [vmem:[#allocation6 + $0x10] sm:$0xff]
    %v96 = vld [vmem:[#allocation6 + $0x18] sm:$0xff]
    %v97 = vld [vmem:[#allocation9] sm:$0xff]
    %v98 = vld [vmem:[#allocation9 + $0x8] sm:$0xff]
    %v99 = vld [vmem:[#allocation9 + $0x10] sm:$0xff]
    %v100 = vld [vmem:[#allocation9 + $0x18] sm:$0xff]
    %v101 = vld [vmem:[#allocation8] sm:$0xff]
    %v102 = vld [vmem:[#allocation8 + $0x8] sm:$0xff]
    %v103 = vld [vmem:[#allocation8 + $0x10] sm:$0xff]
    %v104 = vld [vmem:[#allocation8 + $0x18] sm:$0xff]
    %v105 = vmax.f32 %v101, 0.0
    %v106 = vmax.f32 %v102, 0.0
    %v107 = vmax.f32 %v103, 0.0
    %v108 = vmax.f32 %v104, 0.0
    %vm109 = vcmp.ne.f32.partialorder %v101, %v101
    %vm110 = vcmp.ne.f32.partialorder %v102, %v102
    %vm111 = vcmp.ne.f32.partialorder %v103, %v103
    %vm112 = vcmp.ne.f32.partialorder %v104, %v104
    %v113 = vadd.f32 %v101, 0.0
    %v114 = vadd.f32 %v102, 0.0
    %v115 = vadd.f32 %v103, 0.0
    %v116 = vadd.f32 %v104, 0.0
    %v117 = vand.u32 2147483647, %v101
    %v118 = vand.u32 2147483647, %v102
    %v119 = vand.u32 2147483647, %v103
    %v120 = vand.u32 2147483647, %v104
    %v121 = vsub.f32 0.0, %v117
    %v122 = vsub.f32 0.0, %v118
    %v123 = vsub.f32 0.0, %v119
    %v124 = vsub.f32 0.0, %v120
    %v125 = vmul.f32 %v121, 1.442695
    %v126 = vpow.pop %v125
    %v127 = vmul.f32 %v122, 1.442695
    %v128 = vpow.pop %v127
    %v129 = vmul.f32 %v123, 1.442695
    %v130 = vpow.pop %v129
    %v131 = vmul.f32 %v124, 1.442695
    %v132 = vpow.pop %v131
    %v133 = vadd.f32 %v126, 1.0
    %v134 = vlog2.pop %v133
    %v135 = vmul.f32 %v134, 0.6931472
    %v136 = vmul.f32 -0.5, %v126
    %v137 = vadd.f32 %v136, 1.0
    %v138 = vmul.f32 %v137, %v126
    %v139 = vand.u32 2147483647, %v126
    %vm140 = vcmp.lt.f32.partialorder %v139, 0.0004427343
    %v141 = vsel %vm140, %v138, %v135
    %v142 = vadd.f32 %v128, 1.0
    %v143 = vlog2.pop %v142
    %v144 = vmul.f32 %v143, 0.6931472
    %v145 = vmul.f32 -0.5, %v128
    %v146 = vadd.f32 %v145, 1.0
    %v147 = vmul.f32 %v146, %v128
    %v148 = vand.u32 2147483647, %v128
    %vm149 = vcmp.lt.f32.partialorder %v148, 0.0004427343
    %v150 = vsel %vm149, %v147, %v144
    %v151 = vadd.f32 %v130, 1.0
    %v152 = vlog2.pop %v151
    %v153 = vmul.f32 %v152, 0.6931472
    %v154 = vmul.f32 -0.5, %v130
    %v155 = vadd.f32 %v154, 1.0
    %v156 = vmul.f32 %v155, %v130
    %v157 = vand.u32 2147483647, %v130
    %vm158 = vcmp.lt.f32.partialorder %v157, 0.0004427343
    %v159 = vsel %vm158, %v156, %v153
    %v160 = vadd.f32 %v132, 1.0
    %v161 = vlog2.pop %v160
    %v162 = vmul.f32 %v161, 0.6931472
    %v163 = vmul.f32 -0.5, %v132
    %v164 = vadd.f32 %v163, 1.0
    %v165 = vmul.f32 %v164, %v132
    %v166 = vand.u32 2147483647, %v132
    %vm167 = vcmp.lt.f32.partialorder %v166, 0.0004427343
    %v168 = vsel %vm167, %v165, %v162
    %v169 = vadd.f32 %v105, %v141
    %v170 = vadd.f32 %v106, %v150
    %v171 = vadd.f32 %v107, %v159
    %v172 = vadd.f32 %v108, %v168
    %v173 = vsel %vm109, %v113, %v169
    %v174 = vsel %vm110, %v114, %v170
    %v175 = vsel %vm111, %v115, %v171
    %v176 = vsel %vm112, %v116, %v172
    %v177 = vmul.f32 %v97, %v173
    %v178 = vmul.f32 %v98, %v174
    %v179 = vmul.f32 %v99, %v175
    %v180 = vmul.f32 %v100, %v176
    %v181 = vadd.f32 %v93, %v177
    %v182 = vadd.f32 %v94, %v178
    %v183 = vadd.f32 %v95, %v179
    %v184 = vadd.f32 %v96, %v180
    %v185 = vld [vmem:[#allocation2] sm:$0xff]
    %v186 = vld [vmem:[#allocation3] sm:$0xff]
    %vm187 = vcmask 261120
    %v189 = vsel %vm187, %v186, 0
    %191 = vmatpush.msra.mxu0 0.0
    %192 = vmatpush.msra.mxu0 0.0
    %193 = vmatpush.msra.mxu0 0.0
    %194 = vmatpush.msra.mxu0 0.0
    %195 = vmatpush.msra.mxu0 0.0
    %196 = vmatpush.msra.mxu0 0.0
    %197 = vmatpush.msra.mxu0 0.0
    %198 = vmatpush.msra.mxu0 0.0
    %199 = vmatpush.msra.mxu0 0.0
    %200 = vmatpush.msra.mxu0 0.0
    %201 = vmatpush.msra.mxu0 0.0
    %202 = vmatpush.msra.mxu0 0.0
    %203 = vmatpush.msra.mxu0 %v184
    %204 = vmatpush.msra.mxu0 %v183
    %205 = vmatpush.msra.mxu0 %v182
    %206 = vmatpush.msra.mxu0 %v181
    %207 = vmatmul.f32.gmra.mxu0 %v189
    %v208 = vpop.f32.mrf.mxu0
    %v209 = vadd.f32 0.0, %v208
    %210 = vdwg.mxu0
    %v211 = vadd.f32 %v185, %v209
    %212 = vst [vmem:[#allocation2] sm:$0xff] %v211
    // Predicated region
    $region50: #{tpu_custom_call.1} parent=1 // pred_check
      %p213 = pneg %p88
    $region51: #{tpu_custom_call.1} parent=1 // pred_check_branch
      %215 = sbr.rel (%p213) target = $region53
    $region52: #{tpu_custom_call.1} parent=1 // pred_region
      %s216 = smul.u32 0, 128
      %s217 = sshra.s32 %s216, 7
      %s218 = sand.u32 %s216, 127
      %s219 = scalar_lea.vmem %s4, %s217
      %v220 = vld [vmem:[%s219] sm:$0x1]
      %s221 = scalar_lea.vmem %s6, %s217
      %v222 = vld [vmem:[%s221] sm:$0x1]
      %s223 = scalar_lea.vmem %s5, %s217
      %v224 = vld [vmem:[%s223] sm:$0x1]
      %v225 = vmax.f32 %v224, 0.0
      %vm226 = vcmp.ne.f32.partialorder %v224, %v224
      %v227 = vadd.f32 %v224, 0.0
      %v228 = vand.u32 2147483647, %v224
      %v229 = vsub.f32 0.0, %v228
      %v230 = vmul.f32 %v229, 1.442695
      %v231 = vpow.pop %v230
      %v232 = vadd.f32 %v231, 1.0
      %v233 = vlog2.pop %v232
      %v234 = vmul.f32 %v233, 0.6931472
      %v235 = vmul.f32 -0.5, %v231
      %v236 = vadd.f32 %v235, 1.0
      %v237 = vmul.f32 %v236, %v231
      %v238 = vand.u32 2147483647, %v231
      %vm239 = vcmp.lt.f32.partialorder %v238, 0.0004427343
      %v240 = vsel %vm239, %v237, %v234
      %v241 = vadd.f32 %v225, %v240
      %v242 = vsel %vm226, %v227, %v241
      %v243 = vmul.f32 %v222, %v242
      %v244 = vadd.f32 %v220, %v243
      %v245 = vld [vmem:[#allocation2] sm:$0xff]
      %v247 = vperm.slane %v244, 0
      %v249 = vadd.f32 %v245, %v247
      %250 = vst [vmem:[#allocation11] sm:$0xff] %v249
    $region53: #{tpu_custom_call.1} parent=1 // pred_fallthru
      _
    // Predicated region
    $region54: #{tpu_custom_call.1} parent=1 // pred_check
      _
    $region55: #{tpu_custom_call.1} parent=1 // pred_check_branch
      %252 = sbr.rel (0) target = $region57
    $region56: #{tpu_custom_call.1} parent=1 // pred_region
      %254 = vsyncadd [#allocation5], 0
      %s256 = sshll.u32 [#allocation11], 4
      %s257 = int_to_ptr.vmem [resolvable:$true] %s256
      %s258 = sshll.u32 %s7, 4
      %s259 = int_to_ptr.hbm [resolvable:$true] %s258
      %261 = dma.vmem_to_hbm [thread:$0]  %s257, 128, %s259, [#allocation5]
    $region57: #{tpu_custom_call.1} parent=1 // pred_fallthru
      _
    // Predicated region
    $region58: #{tpu_custom_call.1} parent=1 // pred_check
      _
    $region59: #{tpu_custom_call.1} parent=1 // pred_check_branch
      %263 = sbr.rel (0) target = $region61
    $region60: #{tpu_custom_call.1} parent=1 // pred_region
      %265 = dma.done [#allocation5], 128
    $region61: #{tpu_custom_call.1} parent=1 // pred_fallthru
      _
    %266 = vsyncpa [#allocation4], 1
    %267 = vsyncpa [#allocation7], 1
    %268 = vsyncpa [#allocation10], 1
    %269 = vsyncpa [#allocation5], 1

</llo_original>
